<compile_context>
chip_gen: v7x
topology: tpu7x:2x2x1
jax: 0.10.0
libtpu: 0.0.40
codegen_flags: <defaults>
</compile_context>

<pallas_src>
import math

import jax
import jax.numpy as jnp
from jax.experimental import pallas as pl
from jax.experimental.pallas import tpu as pltpu


def _ru(a, b):
    return ((a + b - 1) // b) * b


def _en_embedding_kernel(x_ref, w_ref, pe_ref, glb_ref, o_ref):
    # x_ref:   (S, P, L)    raw patch values for S samples
    # w_ref:   (L, D)       value_embedding weight (transposed), grid-invariant
    # pe_ref:  (P, D)       sinusoidal positional embedding, grid-invariant
    # glb_ref: (S, 1, D)    per-sample glb token row
    # o_ref:   (S, P+1, D)  fused output: P embedded patches + 1 glb row
    S, P, L = x_ref.shape
    D = w_ref.shape[1]
    # One big (S*P, L) x (L, D) MXU matmul per grid step.  The reshapes are
    # layout no-ops when P is a multiple of 8 (sublane-aligned); otherwise
    # Mosaic relayouts them (XLU work; the kernel stays memory-bound).
    x2 = x_ref[...].reshape(S * P, L)
    emb = jnp.dot(x2, w_ref[...], preferred_element_type=jnp.float32)
    emb = emb.reshape(S, P, D) + pe_ref[...][None, :, :]
    o_ref[:, :P, :] = emb.astype(o_ref.dtype)
    o_ref[:, P:, :] = glb_ref[...].astype(o_ref.dtype)


def sinusoidal_pe(max_len, d_model):
    position = jnp.arange(max_len, dtype=jnp.float32)[:, None]
    div_term = jnp.exp(
        jnp.arange(0, d_model, 2, dtype=jnp.float32) * (-math.log(10000.0) / d_model)
    )
    pe = jnp.zeros((max_len, d_model), jnp.float32)
    pe = pe.at[:, 0::2].set(jnp.sin(position * div_term))
    pe = pe.at[:, 1::2].set(jnp.cos(position * div_term))
    return pe


def _vmem_footprint(S, P, L, D):
    """Approx. VMEM bytes for one pipeline config (f32, lane/sublane padded)."""
    x_buf = S * _ru(P, 8) * _ru(L, 128) * 4        # x tile: L lane-pads to 128 (16x raw at L=8)
    out_buf = S * _ru(P + 1, 8) * _ru(D, 128) * 4  # fused output tile
    glb_buf = S * 8 * _ru(D, 128) * 4              # (S, 1, D) tile, sublane-padded to 8
    w_buf = _ru(L, 8) * _ru(D, 128) * 4            # grid-invariant
    pe_buf = _ru(P, 8) * _ru(D, 128) * 4           # grid-invariant
    # Count everything double-buffered (conservative).
    return 2 * (x_buf + out_buf + glb_buf) + 2 * (w_buf + pe_buf)


def _pick_block_samples(N, P, L, D, target_rows=2048, vmem_budget=40 << 20):
    """Samples per grid step: divides N (no pad path), keeps >=2 grid steps when
    possible (v7x megacore), fits the VMEM budget, and targets ~target_rows
    matmul rows per step to amortize the ~0.35us per-step pipeline overhead."""
    divisors = [d for d in range(1, N + 1) if N % d == 0]
    cands = [d for d in divisors if N // d >= 2] or divisors
    fits = [d for d in cands if _vmem_footprint(d, P, L, D) <= vmem_budget]
    pool = fits or [min(cands)]
    under = [d for d in pool if d * P <= target_rows]
    return max(under) if under else min(pool)


def en_embedding_forward(x, weight, glb_token, patch_len, *, out_dtype=None,
                         target_rows=2048):
    """Pallas implementation of EnEmbedding.forward (inference).

    x:         (B, n_vars, seq_len)    float32
    weight:    (d_model, patch_len)    float32  (PyTorch Linear layout, no bias)
    glb_token: (1, n_vars, 1, d_model) float32
    returns:   ((B*n_vars, num_patches+1, d_model), n_vars)
    """
    B, n_vars, seq_len = x.shape
    L = patch_len
    P = seq_len // L                  # unfold(step == size) drops any remainder
    D = weight.shape[0]
    N = B * n_vars
    out_dtype = x.dtype if out_dtype is None else out_dtype

    # unfold(step == size) + reshapes == a plain reshape (after truncation).
    x3 = x[..., : P * L].reshape(N, P, L)
    w = weight.T                                       # (L, D)
    pe = sinusoidal_pe(P, D)                           # (P, D)
    # One glb row per (batch, var) sample — tiny (N, D) materialization,
    # ordered to match torch.cat([emb, glb], dim=2) + reshape.
    glb_rows = jnp.broadcast_to(
        glb_token.reshape(1, n_vars, D), (B, n_vars, D)
    ).reshape(N, 1, D)

    S = _pick_block_samples(N, P, L, D, target_rows=target_rows)
    grid = (N // S,)
    vmem_limit = int(min(64 << 20, max(32 << 20, 2 * _vmem_footprint(S, P, L, D))))

    out = pl.pallas_call(
        _en_embedding_kernel,
        out_shape=jax.ShapeDtypeStruct((N, P + 1, D), out_dtype),
        grid_spec=pltpu.PrefetchScalarGridSpec(
            num_scalar_prefetch=0,
            grid=grid,
            in_specs=[
                pl.BlockSpec((S, P, L), lambda i: (i, 0, 0)),    # patch values
                pl.BlockSpec((L, D), lambda i: (0, 0)),          # weight (resident)
                pl.BlockSpec((P, D), lambda i: (0, 0)),          # pos-emb (resident)
                pl.BlockSpec((S, 1, D), lambda i: (i, 0, 0)),    # glb rows
            ],
            out_specs=pl.BlockSpec((S, P + 1, D), lambda i: (i, 0, 0)),
        ),
        compiler_params=pltpu.CompilerParams(
            dimension_semantics=("parallel",),
            vmem_limit_bytes=vmem_limit,
        ),
        cost_estimate=pl.CostEstimate(
            flops=2 * N * P * L * D,
            bytes_accessed=4 * (N * P * L + L * D + P * D + N * D + N * (P + 1) * D),
            transcendentals=0,
        ),
    )(x3, w, pe, glb_rows)

    # TODO(synk): dropout is treated as inference-mode identity (no RNG mask applied).
    return out, n_vars


def en_embedding_reference(x, weight, glb_token, patch_len):
    # Pure-JAX reference mirroring the PyTorch forward.
    B, n_vars, seq_len = x.shape
    L = patch_len
    P = seq_len // L
    D = weight.shape[0]
    xp = x[..., : P * L].reshape(B * n_vars, P, L)
    emb = jnp.einsum("npl,dl->npd", xp, weight) + sinusoidal_pe(P, D)[None]
    emb = emb.reshape(B, n_vars, P, D)
    glb = jnp.broadcast_to(glb_token, (B, n_vars, 1, D))
    out = jnp.concatenate([emb, glb], axis=2).reshape(B * n_vars, P + 1, D)
    return out, n_vars


if __name__ == "__main__":
    # Small, module-consistent shapes.  d_model a multiple of 128 keeps the
    # output store lane-dense; num_patches = seq_len/patch_len = 8 keeps the
    # in-kernel reshapes sublane-aligned (layout no-ops).
    B, n_vars, seq_len = 2, 4, 64
    patch_len, d_model = 8, 128

    key = jax.random.PRNGKey(0)
    k_x, k_w, k_g = jax.random.split(key, 3)
    x = jax.random.normal(k_x, (B, n_vars, seq_len), dtype=jnp.float32)
    weight = jax.random.normal(k_w, (d_model, patch_len), dtype=jnp.float32) * 0.1
    glb_token = jax.random.normal(k_g, (1, n_vars, 1, d_model), dtype=jnp.float32)

    out, nv = en_embedding_forward(x, weight, glb_token, patch_len)
    out = jax.block_until_ready(out)

    ref, _ = en_embedding_reference(x, weight, glb_token, patch_len)
    assert out.shape == (B * n_vars, seq_len // patch_len + 1, d_model)
    assert nv == n_vars
    # Both paths use the TPU default matmul precision; pass
    # precision=jax.lax.Precision.HIGHEST to the dot if bit-closeness to an
    # f32 PyTorch Linear is required (still cheap: the kernel is memory-bound).
    assert jnp.allclose(out, ref, atol=1e-3, rtol=1e-3)

    print("KERNEL_OK")
</pallas_src>

<mosaic_0001>
module attributes {stable_mosaic.version = 11 : i64} {
  func.func @_en_embedding_kernel(%arg0: i32, %arg1: memref<4x8x8xf32, #tpu.memory_space<vmem>>, %arg2: memref<8x128xf32, #tpu.memory_space<vmem>>, %arg3: memref<8x128xf32, #tpu.memory_space<vmem>>, %arg4: memref<4x1x128xf32, #tpu.memory_space<vmem>>, %arg5: memref<4x9x128xf32, #tpu.memory_space<vmem>>) attributes {dimension_semantics = [#tpu.dimension_semantics<parallel>], iteration_bounds = array<i64: 2>, scalar_prefetch = 0 : i64, scratch_operands = 0 : i64, tpu.core_type = #tpu.core_type<tc>, window_params = [{transform_indices = @transform_0, window_bounds = array<i64: 4, 8, 8>}, {pipeline_mode = #tpu.pipeline_mode<synchronous>, transform_indices = @transform_1, window_bounds = array<i64: 8, 128>}, {pipeline_mode = #tpu.pipeline_mode<synchronous>, transform_indices = @transform_2, window_bounds = array<i64: 8, 128>}, {transform_indices = @transform_3, window_bounds = array<i64: 4, 1, 128>}, {transform_indices = @transform_4, window_bounds = array<i64: 4, 9, 128>}]} {
    %c0 = arith.constant 0 : index
    %c0_0 = arith.constant 0 : index
    %c0_1 = arith.constant 0 : index
    %0 = vector.load %arg1[%c0, %c0_0, %c0_1] : memref<4x8x8xf32, #tpu.memory_space<vmem>>, vector<4x8x8xf32>
    %1 = vector.shape_cast %0 : vector<4x8x8xf32> to vector<32x8xf32>
    %c0_2 = arith.constant 0 : index
    %c0_3 = arith.constant 0 : index
    %2 = vector.load %arg2[%c0_2, %c0_3] : memref<8x128xf32, #tpu.memory_space<vmem>>, vector<8x128xf32>
    %cst = arith.constant dense<0.000000e+00> : vector<32x128xf32>
    %3 = tpu.matmul %1, %2, %cst {dimension_numbers = #tpu.dot_dimension_numbers<[1], [0], [0], [1], [0, 0, 1, 1], [], []>} : vector<32x8xf32>, vector<8x128xf32>, vector<32x128xf32> -> vector<32x128xf32>
    %4 = vector.shape_cast %3 : vector<32x128xf32> to vector<4x8x128xf32>
    %c0_4 = arith.constant 0 : index
    %c0_5 = arith.constant 0 : index
    %5 = vector.load %arg3[%c0_4, %c0_5] : memref<8x128xf32, #tpu.memory_space<vmem>>, vector<8x128xf32>
    %6 = vector.shape_cast %5 : vector<8x128xf32> to vector<1x8x128xf32>
    %7 = vector.broadcast %6 : vector<1x8x128xf32> to vector<4x8x128xf32>
    %8 = arith.addf %4, %7 : vector<4x8x128xf32>
    %c0_6 = arith.constant 0 : index
    %c0_7 = arith.constant 0 : index
    %c0_8 = arith.constant 0 : index
    %9 = vector.load %arg5[%c0_6, %c0_7, %c0_8] : memref<4x9x128xf32, #tpu.memory_space<vmem>>, vector<4x8x128xf32>
    tpu.vector_store %arg5[%c0_6, %c0_7, %c0_8], %8 {strides = array<i32>} : memref<4x9x128xf32, #tpu.memory_space<vmem>>, vector<4x8x128xf32>,
    %c0_9 = arith.constant 0 : index
    %c0_10 = arith.constant 0 : index
    %c0_11 = arith.constant 0 : index
    %10 = vector.load %arg4[%c0_9, %c0_10, %c0_11] : memref<4x1x128xf32, #tpu.memory_space<vmem>>, vector<4x1x128xf32>
    %c0_12 = arith.constant 0 : index
    %c8 = arith.constant 8 : index
    %c0_13 = arith.constant 0 : index
    %11 = vector.load %arg5[%c0_12, %c8, %c0_13] : memref<4x9x128xf32, #tpu.memory_space<vmem>>, vector<4x1x128xf32>
    tpu.vector_store %arg5[%c0_12, %c8, %c0_13], %10 {strides = array<i32>} : memref<4x9x128xf32, #tpu.memory_space<vmem>>, vector<4x1x128xf32>,
    return
  }
  func.func @transform_0(%arg0: i32) -> (i32, i32, i32) {
    %c0_i32 = arith.constant 0 : i32
    %c0_i32_0 = arith.constant 0 : i32
    %c0_i32_1 = arith.constant 0 : i32
    return %arg0, %c0_i32, %c0_i32_0 : i32, i32, i32
  }
  func.func @transform_1(%arg0: i32) -> (i32, i32) {
    %c0_i32 = arith.constant 0 : i32
    %c0_i32_0 = arith.constant 0 : i32
    %c0_i32_1 = arith.constant 0 : i32
    return %c0_i32, %c0_i32_0 : i32, i32
  }
  func.func @transform_2(%arg0: i32) -> (i32, i32) {
    %c0_i32 = arith.constant 0 : i32
    %c0_i32_0 = arith.constant 0 : i32
    %c0_i32_1 = arith.constant 0 : i32
    return %c0_i32, %c0_i32_0 : i32, i32
  }
  func.func @transform_3(%arg0: i32) -> (i32, i32, i32) {
    %c0_i32 = arith.constant 0 : i32
    %c0_i32_0 = arith.constant 0 : i32
    %c0_i32_1 = arith.constant 0 : i32
    return %arg0, %c0_i32, %c0_i32_0 : i32, i32, i32
  }
  func.func @transform_4(%arg0: i32) -> (i32, i32, i32) {
    %c0_i32 = arith.constant 0 : i32
    %c0_i32_0 = arith.constant 0 : i32
    %c0_i32_1 = arith.constant 0 : i32
    return %arg0, %c0_i32, %c0_i32_0 : i32, i32, i32
  }
}

</mosaic_0001>

<llo_original>
// kernel: tpu_custom_call.1
$region0: #{tpu_custom_call.1}
  #allocation0 [shape = 'u32[]', space=smem, size = 0x4, offset = 0x4, fixed_abs, tag = 'smem constant byte address 0x4 - core index']
  #allocation1 [shape = 'u32[144,128]{1,0:T(1,128)}', space=vmem, size = 0x12000, scoped, tag = 'internal scratch']
  %s0 = inlined_call_operand.hbm [shape: f32[8,8,8], index: 0, kind: input, shape index: {}]
  %s1 = inlined_call_operand.hbm [shape: f32[8,128], index: 1, kind: input, shape index: {}]
  %s2 = inlined_call_operand.hbm [shape: f32[8,128], index: 2, kind: input, shape index: {}]
  %s3 = inlined_call_operand.vmem [shape: f32[8,1,128], index: 3, kind: input, shape index: {}]
  %s4 = inlined_call_operand.vmem [shape: f32[8,9,128], index: 4, kind: output, shape index: {}]
  %s5 = sld [smem:[#allocation0]]
  $region61: #{tpu_custom_call.1} parent=0
    _
  %s7 = ssub.s32 1, %s5
  %s8 = scalar_select 0, %s7, %s5
  $region1: #{tpu_custom_call.1} parent=0
    #allocation2 [shape = 'u8[32768]{0}', space=vmem, size = 0x8000, scoped, tag = 'input window, operand 0']
    #allocation3 [shape = 's32[2]{0}', space=sflag, size = 0x8, scoped, tag = 'scoped memory for tpu_custom_call.1']
    #allocation4 [shape = 'u8[4096]{0}', space=vmem, size = 0x1000, scoped, tag = 'input window, operand 1, single buffered']
    #allocation5 [shape = 's32[1]{0}', space=sflag, size = 0x4, scoped, tag = 'scoped memory for tpu_custom_call.1']
    #allocation6 [shape = 'u8[4096]{0}', space=vmem, size = 0x1000, scoped, tag = 'input window, operand 2, single buffered']
    %9 = vsyncpa [#allocation3], 0
    %s10 = scalar_lea.sflag [#allocation3], 1
    %11 = vsyncpa %s10, 0
    %12 = vsyncpa [#allocation5], 0
    loop: start=0, step=1, limit=4
    $region2: #{tpu_custom_call.1} parent=1 // loop_pre_header
      _
    $region3: #{tpu_custom_call.1} parent=1 // loop_header
      %s14 = sphi 0, %s18
      %p15 = scmp.ge.s32.totalorder %s14, 4
      %s24 = sphi 0, %s26
      %s27 = sphi 0, %s24
      %s28 = sphi 0, %s27
      %s44 = sphi 0, %s28
      %s48 = sphi 0, %s48
      %s50 = sphi 0, %s48
      %s51 = sphi 0, %s50
      %s65 = sphi 0, %s51
      %s69 = sphi 0, %s69
      %s71 = sphi 0, %s69
      %s72 = sphi 0, %s71
      %s86 = sphi 0, %s72
      %s92 = sphi 0, %s94
      %s95 = sphi 0, %s92
      %s96 = sphi 0, %s95
      %s112 = sphi 0, %s96
      %s118 = sphi 0, %s120
      %s121 = sphi 0, %s118
      %s122 = sphi 0, %s121
      %s138 = sphi 0, %s122
    $region4: #{tpu_custom_call.1} parent=1 // loop_header_branch
      %17 = sbr.rel (%p15) target = $region8
    $region5: #{tpu_custom_call.1} parent=1 // loop_body
      %s19 = ssub.s32 %s14, 1
      %s20 = ssub.s32 %s14, 2
      %s21 = sadd.s32 %s14, 1
      %s22 = ssub.s32 %s14, %s21
      %p23 = scmp.eq.s32.totalorder %s22, 0
      %s25 = sadd.s32 %s24, 1
      %s26 = scalar_select %p23, %s24, %s25
      %p29 = pneg %p23
      %p30 = scmp.eq.s32.totalorder %s14, 1
      %p31 = por %p29, %p30
      %p32 = scmp.ne.s32.totalorder %s24, %s27
      %p33 = scmp.eq.s32.totalorder %s14, 0
      %p34 = por %p32, %p33
      %p35 = scmp.ne.s32.totalorder %s24, %s27
      %p36 = scmp.eq.s32.totalorder %s19, 1
      %p37 = por %p35, %p36
      %p38 = scmp.ne.s32.totalorder %s27, %s28
      %p39 = scmp.eq.s32.totalorder %s19, 0
      %p40 = por %p38, %p39
      %p41 = scmp.ne.s32.totalorder %s27, %s28
      %p42 = scmp.eq.s32.totalorder %s20, 1
      %p43 = por %p41, %p42
      %p45 = scmp.ne.s32.totalorder %s28, %s44
      %p46 = scmp.eq.s32.totalorder %s20, 0
      %p47 = por %p45, %p46
      %s49 = sadd.s32 %s48, 1
      %p52 = scmp.eq.s32.totalorder %s14, 1
      %p53 = scmp.ne.s32.totalorder %s48, %s50
      %p54 = scmp.eq.s32.totalorder %s14, 0
      %p55 = por %p53, %p54
      %p56 = scmp.ne.s32.totalorder %s48, %s50
      %p57 = scmp.eq.s32.totalorder %s19, 1
      %p58 = por %p56, %p57
      %p59 = scmp.ne.s32.totalorder %s50, %s51
      %p60 = scmp.eq.s32.totalorder %s19, 0
      %p61 = por %p59, %p60
      %p62 = scmp.ne.s32.totalorder %s50, %s51
      %p63 = scmp.eq.s32.totalorder %s20, 1
      %p64 = por %p62, %p63
      %p66 = scmp.ne.s32.totalorder %s51, %s65
      %p67 = scmp.eq.s32.totalorder %s20, 0
      %p68 = por %p66, %p67
      %s70 = sadd.s32 %s69, 1
      %p73 = scmp.eq.s32.totalorder %s14, 1
      %p74 = scmp.ne.s32.totalorder %s69, %s71
      %p75 = scmp.eq.s32.totalorder %s14, 0
      %p76 = por %p74, %p75
      %p77 = scmp.ne.s32.totalorder %s69, %s71
      %p78 = scmp.eq.s32.totalorder %s19, 1
      %p79 = por %p77, %p78
      %p80 = scmp.ne.s32.totalorder %s71, %s72
      %p81 = scmp.eq.s32.totalorder %s19, 0
      %p82 = por %p80, %p81
      %p83 = scmp.ne.s32.totalorder %s71, %s72
      %p84 = scmp.eq.s32.totalorder %s20, 1
      %p85 = por %p83, %p84
      %p87 = scmp.ne.s32.totalorder %s72, %s86
      %p88 = scmp.eq.s32.totalorder %s20, 0
      %p89 = por %p87, %p88
      %s90 = ssub.s32 %s14, %s21
      %p91 = scmp.eq.s32.totalorder %s90, 0
      %s93 = sadd.s32 %s92, 1
      %s94 = scalar_select %p91, %s92, %s93
      %p97 = pneg %p91
      %p98 = scmp.eq.s32.totalorder %s14, 1
      %p99 = por %p97, %p98
      %p100 = scmp.ne.s32.totalorder %s92, %s95
      %p101 = scmp.eq.s32.totalorder %s14, 0
      %p102 = por %p100, %p101
      %p103 = scmp.ne.s32.totalorder %s92, %s95
      %p104 = scmp.eq.s32.totalorder %s19, 1
      %p105 = por %p103, %p104
      %p106 = scmp.ne.s32.totalorder %s95, %s96
      %p107 = scmp.eq.s32.totalorder %s19, 0
      %p108 = por %p106, %p107
      %p109 = scmp.ne.s32.totalorder %s95, %s96
      %p110 = scmp.eq.s32.totalorder %s20, 1
      %p111 = por %p109, %p110
      %p113 = scmp.ne.s32.totalorder %s96, %s112
      %p114 = scmp.eq.s32.totalorder %s20, 0
      %p115 = por %p113, %p114
      %s116 = ssub.s32 %s14, %s21
      %p117 = scmp.eq.s32.totalorder %s116, 0
      %s119 = sadd.s32 %s118, 1
      %s120 = scalar_select %p117, %s118, %s119
      %p123 = pneg %p117
      %p124 = scmp.eq.s32.totalorder %s14, 1
      %p125 = por %p123, %p124
      %p126 = scmp.ne.s32.totalorder %s118, %s121
      %p127 = scmp.eq.s32.totalorder %s14, 0
      %p128 = por %p126, %p127
      %p129 = scmp.ne.s32.totalorder %s118, %s121
      %p130 = scmp.eq.s32.totalorder %s19, 1
      %p131 = por %p129, %p130
      %p132 = scmp.ne.s32.totalorder %s121, %s122
      %p133 = scmp.eq.s32.totalorder %s19, 0
      %p134 = por %p132, %p133
      %p135 = scmp.ne.s32.totalorder %s121, %s122
      %p136 = scmp.eq.s32.totalorder %s20, 1
      %p137 = por %p135, %p136
      %p139 = scmp.ne.s32.totalorder %s122, %s138
      %p140 = scmp.eq.s32.totalorder %s20, 0
      %p141 = por %p139, %p140
      %p142 = scmp.le.s32.totalorder 1, %s14
      %p143 = scmp.lt.s32.totalorder %s14, 3
      %p144 = pnand %p142, %p143
      %p145 = pneg %p144
      // Predicated region
      $region9: #{tpu_custom_call.1} parent=5 // pred_check
        _
      $region10: #{tpu_custom_call.1} parent=5 // pred_check_branch
        %147 = sbr.rel (%p144) target = $region12
      $region11: #{tpu_custom_call.1} parent=5 // pred_region
        %s148 = ssub.s32 %s14, 1
        // Predicated region
        $region13: #{tpu_custom_call.1} parent=11 // pred_check
          %p149 = pneg %p61
        $region14: #{tpu_custom_call.1} parent=11 // pred_check_branch
          %151 = sbr.rel (%p149) target = $region16
        $region15: #{tpu_custom_call.1} parent=11 // pred_region
          %s153 = ssub.s32 128, 128
          %154 = vsyncadd [#allocation5], %s153
          %s156 = sshll.u32 [#allocation4], 4
          %s157 = int_to_ptr.vmem [resolvable:$true] %s156
          %159 = dma.hbm_to_vmem [thread:$0]  %s1, 128, %s157, [#allocation5]
        $region16: #{tpu_custom_call.1} parent=11 // pred_fallthru
          _
        // Predicated region
        $region17: #{tpu_custom_call.1} parent=11 // pred_check
          %p160 = pneg %p82
        $region18: #{tpu_custom_call.1} parent=11 // pred_check_branch
          %162 = sbr.rel (%p160) target = $region20
        $region19: #{tpu_custom_call.1} parent=11 // pred_region
          %s164 = ssub.s32 128, 128
          %165 = vsyncadd [#allocation5], %s164
          %s167 = sshll.u32 [#allocation6], 4
          %s168 = int_to_ptr.vmem [resolvable:$true] %s167
          %170 = dma.hbm_to_vmem [thread:$0]  %s2, 128, %s168, [#allocation5]
        $region20: #{tpu_custom_call.1} parent=11 // pred_fallthru
          _
      $region12: #{tpu_custom_call.1} parent=5 // pred_fallthru
        _
      %p171 = scmp.lt.s32.totalorder %s14, 2
      // Predicated region
      $region21: #{tpu_custom_call.1} parent=5 // pred_check
        %p172 = pneg %p171
      $region22: #{tpu_custom_call.1} parent=5 // pred_check_branch
        %174 = sbr.rel (%p172) target = $region24
      $region23: #{tpu_custom_call.1} parent=5 // pred_region
        // Predicated region
        $region25: #{tpu_custom_call.1} parent=23 // pred_check
          %p175 = pneg %p34
        $region26: #{tpu_custom_call.1} parent=23 // pred_check_branch
          %177 = sbr.rel (%p175) target = $region28
        $region27: #{tpu_custom_call.1} parent=23 // pred_region
          %s178 = sand.u32 %s24, 1
          %s179 = scalar_lea.sflag [#allocation3], %s178
          %s180 = sand.u32 %s24, 1
          %s181 = smul.addr %s180, 32
          %s182 = scalar_lea.vmem [#allocation2], %s181
          %s183 = smul.u32 4, %s14
          %s185 = ssub.s32 512, 512
          %186 = vsyncadd %s179, %s185
          %s187 = smul.addr %s183, 128
          %s188 = scalar_lea.hbm %s0, %s187
          %s189 = sshll.u32 %s182, 4
          %s190 = int_to_ptr.vmem [resolvable:$true] %s189
          %195 = dma.hbm_to_vmem [thread:$0]  %s188, 512, %s190, %s179, 128, 128, 8
        $region28: #{tpu_custom_call.1} parent=23 // pred_fallthru
          _
        // Predicated region
        $region29: #{tpu_custom_call.1} parent=23 // pred_check
          %p196 = pneg %p102
        $region30: #{tpu_custom_call.1} parent=23 // pred_check_branch
          %198 = sbr.rel (%p196) target = $region32
        $region31: #{tpu_custom_call.1} parent=23 // pred_region
          %s199 = smul.u32 4, %s14
          %p200 = scmp.lt.s32.totalorder %s199, 7
          %s201 = scalar_select %p200, %s199, 7
          %s202 = scalar_lea.vmem %s3, %s201
          %s203 = smul.u32 4, %s14
        $region32: #{tpu_custom_call.1} parent=23 // pred_fallthru
          _
      $region24: #{tpu_custom_call.1} parent=5 // pred_fallthru
        _
      %p204 = scmp.le.s32.totalorder 1, %s14
      %p205 = scmp.lt.s32.totalorder %s14, 3
      %p206 = pnand %p204, %p205
      %p207 = pneg %p206
      // Predicated region
      $region33: #{tpu_custom_call.1} parent=5 // pred_check
        _
      $region34: #{tpu_custom_call.1} parent=5 // pred_check_branch
        %209 = sbr.rel (%p206) target = $region36
      $region35: #{tpu_custom_call.1} parent=5 // pred_region
        %s210 = ssub.s32 %s14, 1
        %s211 = sand.u32 %s27, 1
        %s212 = scalar_lea.sflag [#allocation3], %s211
        %s213 = sand.u32 %s27, 1
        %s214 = smul.addr %s213, 32
        %s215 = scalar_lea.vmem [#allocation2], %s214
        // Predicated region
        $region37: #{tpu_custom_call.1} parent=35 // pred_check
          %p216 = pneg %p40
        $region38: #{tpu_custom_call.1} parent=35 // pred_check_branch
          %218 = sbr.rel (%p216) target = $region40
        $region39: #{tpu_custom_call.1} parent=35 // pred_region
          %219 = dma.done %s212, 512
        $region40: #{tpu_custom_call.1} parent=35 // pred_fallthru
          _
        // Predicated region
        $region41: #{tpu_custom_call.1} parent=35 // pred_check
          %p220 = pneg %p61
        $region42: #{tpu_custom_call.1} parent=35 // pred_check_branch
          %222 = sbr.rel (%p220) target = $region44
        $region43: #{tpu_custom_call.1} parent=35 // pred_region
          %223 = dma.done [#allocation5], 128
        $region44: #{tpu_custom_call.1} parent=35 // pred_fallthru
          _
        // Predicated region
        $region45: #{tpu_custom_call.1} parent=35 // pred_check
          %p224 = pneg %p82
        $region46: #{tpu_custom_call.1} parent=35 // pred_check_branch
          %226 = sbr.rel (%p224) target = $region48
        $region47: #{tpu_custom_call.1} parent=35 // pred_region
          %227 = dma.done [#allocation5], 128
        $region48: #{tpu_custom_call.1} parent=35 // pred_fallthru
          _
        %s228 = sand.u32 %s27, 1
        %s229 = scalar_lea.sflag [#allocation3], %s228
        %s230 = sand.u32 %s27, 1
        %s231 = smul.addr %s230, 32
        %s232 = scalar_lea.vmem [#allocation2], %s231
        %p233 = pneg %p40
        %p234 = pneg %p37
        %p235 = pneg %p61
        %p236 = pneg %p58
        %p237 = pneg %p82
        %p238 = pneg %p79
        %s239 = smul.u32 4, %s19
        %p240 = scmp.lt.s32.totalorder %s239, 7
        %s241 = scalar_select %p240, %s239, 7
        %s242 = scalar_lea.vmem %s3, %s241
        %p243 = pneg %p108
        %p244 = pneg %p105
        %p245 = pneg %p134
        %p246 = pneg %p131
        %s247 = smul.u32 4, %s19
        %p248 = scmp.lt.s32.totalorder %s247, 7
        %s249 = scalar_select %p248, %s247, 7
        %s250 = smul.addr %s249, 2
        %s251 = smul.addr %s250, 8
        %s252 = scalar_lea.vmem %s4, %s251
        %s253 = smul.u32 4, %s19
        %s254 = smul.u32 4, %s19
        %p255 = scmp.lt.s32.totalorder %s254, 7
        %s256 = scalar_select %p255, %s254, 7
        %s257 = scalar_lea.vmem %s3, %s256
        %s258 = smul.u32 4, %s19
        %s259 = smul.u32 4, %s19
        %p260 = scmp.lt.s32.totalorder %s259, 7
        %s261 = scalar_select %p260, %s259, 7
        %s262 = smul.addr %s261, 2
        %s263 = smul.addr %s262, 8
        %s264 = scalar_lea.vmem %s4, %s263
        %s265 = smul.u32 4, %s19
        %v266 = vld [vmem:[%s215] sm:$0xff]
        %v267 = vld [vmem:[%s215 + $0x8] sm:$0xff]
        %v268 = vld [vmem:[%s215 + $0x10] sm:$0xff]
        %v269 = vld [vmem:[%s215 + $0x18] sm:$0xff]
        %v270 = vld [vmem:[#allocation4] sm:$0xff]
        %vm271 = vcmask 64512
        %v273 = vsel %vm271, %v266, 0
        %v276 = vsel %vm271, %v267, 0
        %v279 = vsel %vm271, %v268, 0
        %v282 = vsel %vm271, %v269, 0
        %284 = vmatprep.subr.mxu0 0.0
        %285 = vmatpush1.msra.mxu0 %v270
        %286 = vmatprep.subr.mxu0 0.0
        %287 = vmatpush1.msra.mxu0 0.0
        %288 = vmatprep.subr.mxu0 0.0
        %289 = vmatpush1.msra.mxu0 0.0
        %290 = vmatprep.subr.mxu0 0.0
        %291 = vmatpush1.msra.mxu0 0.0
        %292 = vmatprep.subr.mxu0 0.0
        %293 = vmatpush1.msra.mxu0 0.0
        %294 = vmatprep.subr.mxu0 0.0
        %295 = vmatpush1.msra.mxu0 0.0
        %296 = vmatprep.subr.mxu0 0.0
        %297 = vmatpush1.msra.mxu0 0.0
        %298 = vmatprep.subr.mxu0 0.0
        %299 = vmatpush1.msra.mxu0 0.0
        %300 = vmatprep.subr.mxu0 0.0
        %301 = vmatpush1.msra.mxu0 0.0
        %302 = vmatprep.subr.mxu0 0.0
        %303 = vmatpush1.msra.mxu0 0.0
        %304 = vmatprep.subr.mxu0 0.0
        %305 = vmatpush1.msra.mxu0 0.0
        %306 = vmatprep.subr.mxu0 0.0
        %307 = vmatpush1.msra.mxu0 0.0
        %308 = vmatprep.subr.mxu0 0.0
        %309 = vmatpush1.msra.mxu0 0.0
        %310 = vmatprep.subr.mxu0 0.0
        %311 = vmatpush1.msra.mxu0 0.0
        %312 = vmatprep.subr.mxu0 0.0
        %313 = vmatpush1.msra.mxu0 0.0
        %314 = vmatprep.subr.mxu0 0.0
        %315 = vmatpush1.msra.mxu0 0.0
        %316 = vmatprep.subr.mxu0 0.0
        %317 = vmatpush1.msra.mxu0 0.0
        %318 = vmatprep.subr.mxu0 0.0
        %319 = vmatpush1.msra.mxu0 0.0
        %320 = vmatprep.subr.mxu0 0.0
        %321 = vmatpush1.msra.mxu0 0.0
        %322 = vmatprep.subr.mxu0 0.0
        %323 = vmatpush1.msra.mxu0 0.0
        %324 = vmatprep.subr.mxu0 0.0
        %325 = vmatpush1.msra.mxu0 0.0
        %326 = vmatprep.subr.mxu0 0.0
        %327 = vmatpush1.msra.mxu0 0.0
        %328 = vmatprep.subr.mxu0 0.0
        %329 = vmatpush1.msra.mxu0 0.0
        %330 = vmatprep.subr.mxu0 0.0
        %331 = vmatpush1.msra.mxu0 0.0
        %332 = vmatprep.subr.mxu0 0.0
        %333 = vmatpush1.msra.mxu0 0.0
        %334 = vmatprep.subr.mxu0 0.0
        %335 = vmatpush1.msra.mxu0 0.0
        %336 = vmatprep.subr.mxu0 0.0
        %337 = vmatpush1.msra.mxu0 0.0
        %338 = vmatprep.subr.mxu0 0.0
        %339 = vmatpush1.msra.mxu0 0.0
        %340 = vmatprep.subr.mxu0 0.0
        %341 = vmatpush1.msra.mxu0 0.0
        %342 = vmatprep.subr.mxu0 0.0
        %343 = vmatpush1.msra.mxu0 0.0
        %344 = vmatprep.subr.mxu0 0.0
        %345 = vmatpush1.msra.mxu0 0.0
        %346 = vmatprep.subr.mxu0 0.0
        %347 = vmatpush1.msra.mxu0 0.0
        %348 = vmatprep.mubr.f32.mxu0 0.0
        %349 = vmatmul.mubr.f32.gmra.mrb[0].mxu0 %v273
        %v350 = vpop.f32.mrb[0].mxu0
        %v351 = vadd.f32 0.0, %v350
        %v352 = vpop.f32.mrb[0].mxu0
        %353 = vmatprep.mubr.f32.mxu0 0.0
        %354 = vmatmul.mubr.f32.gmra.mrb[0].mxu0 %v276
        %v355 = vpop.f32.mrb[0].mxu0
        %v356 = vadd.f32 0.0, %v355
        %v357 = vpop.f32.mrb[0].mxu0
        %358 = vmatprep.mubr.f32.mxu0 0.0
        %359 = vmatmul.mubr.f32.gmra.mrb[0].mxu0 %v279
        %v360 = vpop.f32.mrb[0].mxu0
        %v361 = vadd.f32 0.0, %v360
        %v362 = vpop.f32.mrb[0].mxu0
        %363 = vmatprep.mubr.f32.mxu0 0.0
        %364 = vmatmul.mubr.f32.gmra.mrb[0].mxu0 %v282
        %v365 = vpop.f32.mrb[0].mxu0
        %v366 = vadd.f32 0.0, %v365
        %v367 = vpop.f32.mrb[0].mxu0
        %368 = vdwg.mxu0
        %v369 = vld [vmem:[#allocation6] sm:$0xff]
        %v370 = vadd.f32 %v351, %v369
        %v371 = vadd.f32 %v356, %v369
        %v372 = vadd.f32 %v361, %v369
        %v373 = vadd.f32 %v366, %v369
        %374 = vst [vmem:[%s264] sm:$0xff] %v370
        %375 = vst [vmem:[%s264 + $0x10] sm:$0xff] %v371
        %376 = vst [vmem:[%s264 + $0x20] sm:$0xff] %v372
        %377 = vst [vmem:[%s264 + $0x30] sm:$0xff] %v373
        %v378 = vld [vmem:[%s257] sm:$0x1]
        %v379 = vld [vmem:[%s257 + $0x1] sm:$0x1]
        %v380 = vld [vmem:[%s257 + $0x2] sm:$0x1]
        %v381 = vld [vmem:[%s257 + $0x3] sm:$0x1]
        %382 = vst [vmem:[%s264 + $0x8] sm:$0x1] %v378
        %383 = vst [vmem:[%s264 + $0x18] sm:$0x1] %v379
        %384 = vst [vmem:[%s264 + $0x28] sm:$0x1] %v380
        %385 = vst [vmem:[%s264 + $0x38] sm:$0x1] %v381
        %s386 = smul.u32 4, %s19
        %p387 = scmp.lt.s32.totalorder %s386, 7
        %s388 = scalar_select %p387, %s386, 7
        %s389 = smul.addr %s388, 2
        %s390 = smul.addr %s389, 8
        %s391 = scalar_lea.vmem %s4, %s390
        // Predicated region
        $region49: #{tpu_custom_call.1} parent=35 // pred_check
          %p392 = pneg %p131
        $region50: #{tpu_custom_call.1} parent=35 // pred_check_branch
          %394 = sbr.rel (%p392) target = $region52
        $region51: #{tpu_custom_call.1} parent=35 // pred_region
          %s395 = smul.u32 4, %s19
        $region52: #{tpu_custom_call.1} parent=35 // pred_fallthru
          _
      $region36: #{tpu_custom_call.1} parent=5 // pred_fallthru
        _
      %p396 = scmp.le.s32.totalorder 2, %s14
      // Predicated region
      $region53: #{tpu_custom_call.1} parent=5 // pred_check
        %p397 = pneg %p396
      $region54: #{tpu_custom_call.1} parent=5 // pred_check_branch
        %399 = sbr.rel (%p397) target = $region56
      $region55: #{tpu_custom_call.1} parent=5 // pred_region
        %s400 = ssub.s32 %s14, 2
        // Predicated region
        $region57: #{tpu_custom_call.1} parent=55 // pred_check
          %p401 = pneg %p137
        $region58: #{tpu_custom_call.1} parent=55 // pred_check_branch
          %403 = sbr.rel (%p401) target = $region60
        $region59: #{tpu_custom_call.1} parent=55 // pred_region
          %s404 = smul.u32 4, %s20
          %p405 = scmp.lt.s32.totalorder %s404, 7
          %s406 = scalar_select %p405, %s404, 7
          %s407 = smul.addr %s406, 2
          %s408 = smul.addr %s407, 8
          %s409 = scalar_lea.vmem %s4, %s408
        $region60: #{tpu_custom_call.1} parent=55 // pred_fallthru
          _
      $region56: #{tpu_custom_call.1} parent=5 // pred_fallthru
        _
    $region6: #{tpu_custom_call.1} parent=1 // loop_footer
      %s18 = sadd.s32 1, %s14
    $region7: #{tpu_custom_call.1} parent=1 // loop_footer_branch
      %13 = sbr.rel target = $region3
    $region8: #{tpu_custom_call.1} parent=1 // loop_exit
      _
    %410 = vsyncpa [#allocation3], 1
    %s411 = scalar_lea.sflag [#allocation3], 1
    %412 = vsyncpa %s411, 1
    %413 = vsyncpa [#allocation5], 1

</llo_original>
